<compile_context>
chip_gen: v7x
topology: tpu7x:2x2x1
jax: 0.10.0
libtpu: 0.0.40
codegen_flags: <defaults>
</compile_context>

<pallas_src>
import functools

import jax
import jax.numpy as jnp
from jax.experimental import pallas as pl
from jax.experimental.pallas import tpu as pltpu

IN_F = 4      # 3 (x0) + 1 (t)
HIDDEN = 64
OUT_F = 3


def _mlp_kernel(inp_ref,                       # (4, TILE)  f32 feature-major input
                w1_ref, b1_ref,                # (64, 4)  bf16, (64, 1) f32
                w2_ref, b2_ref,                # (64, 64) bf16, (64, 1) f32
                w3_ref, b3_ref,                # (64, 64) bf16, (64, 1) f32
                w4_ref, b4_ref,                # (3, 64)  bf16, (3, 1)  f32
                out_ref):                      # (3, TILE) f32 feature-major output
    # bf16 matmul operands, f32 MXU accumulation; bias add + tanh in f32.
    x = inp_ref[...].astype(jnp.bfloat16)                                   # (4, T)
    h = jnp.tanh(jnp.dot(w1_ref[...], x,
                         preferred_element_type=jnp.float32) + b1_ref[...])  # (64, T) f32
    h = jnp.tanh(jnp.dot(w2_ref[...], h.astype(jnp.bfloat16),
                         preferred_element_type=jnp.float32) + b2_ref[...])  # (64, T) f32
    h = jnp.tanh(jnp.dot(w3_ref[...], h.astype(jnp.bfloat16),
                         preferred_element_type=jnp.float32) + b3_ref[...])  # (64, T) f32
    out_ref[...] = (jnp.dot(w4_ref[...], h.astype(jnp.bfloat16),
                            preferred_element_type=jnp.float32)
                    + b4_ref[...]).astype(out_ref.dtype)                     # (3, T)


@functools.partial(jax.jit, static_argnames=("tile",))
def cloth_pinn_forward(x0, t, params, *, tile=8192):
    """x0: (N, 3) f32, t: (N, 1) f32 -> (N, 3) f32."""
    (w1, b1), (w2, b2), (w3, b3), (w4, b4) = params
    N = x0.shape[0]

    # concat([x0, t], 1) fused with the feature-major transpose + lane padding
    # in XLA glue (one small copy); the kernel then streams a (4, N_pad) slab.
    inp_fm = jnp.concatenate([x0, t], axis=1).T.astype(jnp.float32)   # (4, N)

    # Tile sizing: big tiles amortize the ~0.35 us/step grid overhead, but keep
    # >= ~4 grid steps when the batch allows (pipeline / megacore overlap), and
    # never go below one 128-lane vreg.
    tile = int(tile)
    lane_pad_n = pl.cdiv(N, 128) * 128
    max_tile_for_steps = max(((lane_pad_n // 4) // 128) * 128, 128)
    tile = max(128, min(tile, max_tile_for_steps, lane_pad_n))

    n_pad = pl.cdiv(N, tile) * tile
    if n_pad != N:
        inp_fm = jnp.pad(inp_fm, ((0, 0), (0, n_pad - N)))
    grid = (n_pad // tile,)

    # Weights bf16 (half DMA, native MXU dtype); biases stay f32.
    w1b, w2b, w3b, w4b = (w.astype(jnp.bfloat16) for w in (w1, w2, w3, w4))
    b1f, b2f, b3f, b4f = (b.astype(jnp.float32) for b in (b1, b2, b3, b4))

    # Weights/biases: full-array blocks, constant index_map -> VMEM-resident.
    const = lambda shape: pl.BlockSpec(shape, lambda i: (0,) * len(shape))

    param_bytes = sum(int(a.size) * a.dtype.itemsize
                      for a in (w1b, b1f, w2b, b2f, w3b, b3f, w4b, b4f))
    cost = pl.CostEstimate(
        flops=2 * n_pad * (IN_F * HIDDEN + 2 * HIDDEN * HIDDEN + HIDDEN * OUT_F),
        transcendentals=3 * HIDDEN * n_pad,
        bytes_accessed=4 * n_pad * (IN_F + OUT_F) + param_bytes,
    )

    # Only raise the scoped-VMEM limit if the tile is pushed very large
    # (default limits: 16 MiB v5e / 32 MiB v6e,v7x; v7x physical cap 64 MiB).
    vmem_limit = (48 * 1024 * 1024) if tile >= 16384 else None

    out_fm = pl.pallas_call(
        _mlp_kernel,
        out_shape=jax.ShapeDtypeStruct((OUT_F, n_pad), jnp.float32),
        grid=grid,
        in_specs=[
            pl.BlockSpec((IN_F, tile), lambda i: (0, i)),   # batch-tiled input
            const(w1b.shape), const(b1f.shape),
            const(w2b.shape), const(b2f.shape),
            const(w3b.shape), const(b3f.shape),
            const(w4b.shape), const(b4f.shape),
        ],
        out_specs=pl.BlockSpec((OUT_F, tile), lambda i: (0, i)),  # lane-dense stores
        compiler_params=pltpu.CompilerParams(
            dimension_semantics=("parallel",),   # v7x megacore sharding over batch
            vmem_limit_bytes=vmem_limit),
        cost_estimate=cost,
    )(inp_fm, w1b, b1f, w2b, b2f, w3b, b3f, w4b, b4f)

    return out_fm[:, :N].T                                            # (N, 3)


def init_params(key):
    """Deterministic parameters in native PyTorch layout: W (out, in), b (out, 1)."""
    dims = [(IN_F, HIDDEN), (HIDDEN, HIDDEN), (HIDDEN, HIDDEN), (HIDDEN, OUT_F)]
    params = []
    for i, (fan_in, fan_out) in enumerate(dims):
        kw, kb = jax.random.split(jax.random.fold_in(key, i))
        bound = 1.0 / float(fan_in) ** 0.5   # nn.Linear default U(-1/sqrt(in), 1/sqrt(in))
        w = jax.random.uniform(kw, (fan_out, fan_in), jnp.float32, -bound, bound)
        b = jax.random.uniform(kb, (fan_out, 1), jnp.float32, -bound, bound)
        params.append((w, b))
    return params


def reference_forward(x0, t, params):
    """Pure-JAX f32 reference (mirrors the PyTorch module exactly)."""
    h = jnp.concatenate([x0, t], axis=1)
    (w1, b1), (w2, b2), (w3, b3), (w4, b4) = params
    h = jnp.tanh(h @ w1.T + b1[:, 0])
    h = jnp.tanh(h @ w2.T + b2[:, 0])
    h = jnp.tanh(h @ w3.T + b3[:, 0])
    return h @ w4.T + b4[:, 0]


if __name__ == "__main__":
    key = jax.random.PRNGKey(0)
    k_params, k_x0, k_t = jax.random.split(key, 3)
    params = init_params(k_params)

    # bf16 matmul operands (f32 accumulate) => relaxed tolerance vs. the f32 reference.
    ATOL = RTOL = 2e-2

    # Test 1: tiny batch -> single ragged tile (8 rows padded to 128 lanes).
    N = 8
    x0 = jax.random.normal(k_x0, (N, 3), jnp.float32)
    t = jax.random.uniform(k_t, (N, 1), jnp.float32)
    out = jax.block_until_ready(cloth_pinn_forward(x0, t, params))
    ref = reference_forward(x0, t, params)
    assert out.shape == (N, 3), out.shape
    assert jnp.allclose(out, ref, atol=ATOL, rtol=RTOL), "mismatch vs reference (N=8)"

    # Test 2: multi-step grid with a ragged last tile (300 rows -> 128-lane tiles, 3 steps).
    N2 = 300
    x0b = jax.random.normal(jax.random.fold_in(k_x0, 1), (N2, 3), jnp.float32)
    tb = jax.random.uniform(jax.random.fold_in(k_t, 1), (N2, 1), jnp.float32)
    out2 = jax.block_until_ready(cloth_pinn_forward(x0b, tb, params))
    ref2 = reference_forward(x0b, tb, params)
    assert out2.shape == (N2, 3), out2.shape
    assert jnp.allclose(out2, ref2, atol=ATOL, rtol=RTOL), "mismatch vs reference (N=300)"

    print("KERNEL_OK")
</pallas_src>

<mosaic_0001>
module attributes {stable_mosaic.version = 11 : i64} {
  func.func @_mlp_kernel(%arg0: i32, %arg1: memref<4x128xf32, #tpu.memory_space<vmem>>, %arg2: memref<64x4xbf16, #tpu.memory_space<vmem>>, %arg3: memref<64x1xf32, #tpu.memory_space<vmem>>, %arg4: memref<64x64xbf16, #tpu.memory_space<vmem>>, %arg5: memref<64x1xf32, #tpu.memory_space<vmem>>, %arg6: memref<64x64xbf16, #tpu.memory_space<vmem>>, %arg7: memref<64x1xf32, #tpu.memory_space<vmem>>, %arg8: memref<3x64xbf16, #tpu.memory_space<vmem>>, %arg9: memref<3x1xf32, #tpu.memory_space<vmem>>, %arg10: memref<3x128xf32, #tpu.memory_space<vmem>>) attributes {dimension_semantics = [#tpu.dimension_semantics<parallel>], iteration_bounds = array<i64: 1>, scalar_prefetch = 0 : i64, scratch_operands = 0 : i64, tpu.core_type = #tpu.core_type<tc>, window_params = [{transform_indices = @transform_0, window_bounds = array<i64: 4, 128>}, {pipeline_mode = #tpu.pipeline_mode<synchronous>, transform_indices = @transform_1, window_bounds = array<i64: 64, 4>}, {pipeline_mode = #tpu.pipeline_mode<synchronous>, transform_indices = @transform_2, window_bounds = array<i64: 64, 1>}, {pipeline_mode = #tpu.pipeline_mode<synchronous>, transform_indices = @transform_3, window_bounds = array<i64: 64, 64>}, {pipeline_mode = #tpu.pipeline_mode<synchronous>, transform_indices = @transform_4, window_bounds = array<i64: 64, 1>}, {pipeline_mode = #tpu.pipeline_mode<synchronous>, transform_indices = @transform_5, window_bounds = array<i64: 64, 64>}, {pipeline_mode = #tpu.pipeline_mode<synchronous>, transform_indices = @transform_6, window_bounds = array<i64: 64, 1>}, {pipeline_mode = #tpu.pipeline_mode<synchronous>, transform_indices = @transform_7, window_bounds = array<i64: 3, 64>}, {pipeline_mode = #tpu.pipeline_mode<synchronous>, transform_indices = @transform_8, window_bounds = array<i64: 3, 1>}, {transform_indices = @transform_9, window_bounds = array<i64: 3, 128>}]} {
    %c0 = arith.constant 0 : index
    %c0_0 = arith.constant 0 : index
    %0 = vector.load %arg1[%c0, %c0_0] : memref<4x128xf32, #tpu.memory_space<vmem>>, vector<4x128xf32>
    %1 = arith.truncf %0 : vector<4x128xf32> to vector<4x128xbf16>
    %c0_1 = arith.constant 0 : index
    %c0_2 = arith.constant 0 : index
    %2 = vector.load %arg2[%c0_1, %c0_2] : memref<64x4xbf16, #tpu.memory_space<vmem>>, vector<64x4xbf16>
    %cst = arith.constant dense<0.000000e+00> : vector<64x128xf32>
    %3 = tpu.matmul %2, %1, %cst {dimension_numbers = #tpu.dot_dimension_numbers<[1], [0], [0], [1], [0, 0, 1, 1], [], []>} : vector<64x4xbf16>, vector<4x128xbf16>, vector<64x128xf32> -> vector<64x128xf32>
    %c0_3 = arith.constant 0 : index
    %c0_4 = arith.constant 0 : index
    %4 = vector.load %arg3[%c0_3, %c0_4] : memref<64x1xf32, #tpu.memory_space<vmem>>, vector<64x1xf32>
    %5 = vector.broadcast %4 : vector<64x1xf32> to vector<64x128xf32>
    %6 = arith.addf %3, %5 : vector<64x128xf32>
    %7 = math.tanh %6 : vector<64x128xf32>
    %c0_5 = arith.constant 0 : index
    %c0_6 = arith.constant 0 : index
    %8 = vector.load %arg4[%c0_5, %c0_6] : memref<64x64xbf16, #tpu.memory_space<vmem>>, vector<64x64xbf16>
    %9 = arith.truncf %7 : vector<64x128xf32> to vector<64x128xbf16>
    %cst_7 = arith.constant dense<0.000000e+00> : vector<64x128xf32>
    %10 = tpu.matmul %8, %9, %cst_7 {dimension_numbers = #tpu.dot_dimension_numbers<[1], [0], [0], [1], [0, 0, 1, 1], [], []>} : vector<64x64xbf16>, vector<64x128xbf16>, vector<64x128xf32> -> vector<64x128xf32>
    %c0_8 = arith.constant 0 : index
    %c0_9 = arith.constant 0 : index
    %11 = vector.load %arg5[%c0_8, %c0_9] : memref<64x1xf32, #tpu.memory_space<vmem>>, vector<64x1xf32>
    %12 = vector.broadcast %11 : vector<64x1xf32> to vector<64x128xf32>
    %13 = arith.addf %10, %12 : vector<64x128xf32>
    %14 = math.tanh %13 : vector<64x128xf32>
    %c0_10 = arith.constant 0 : index
    %c0_11 = arith.constant 0 : index
    %15 = vector.load %arg6[%c0_10, %c0_11] : memref<64x64xbf16, #tpu.memory_space<vmem>>, vector<64x64xbf16>
    %16 = arith.truncf %14 : vector<64x128xf32> to vector<64x128xbf16>
    %cst_12 = arith.constant dense<0.000000e+00> : vector<64x128xf32>
    %17 = tpu.matmul %15, %16, %cst_12 {dimension_numbers = #tpu.dot_dimension_numbers<[1], [0], [0], [1], [0, 0, 1, 1], [], []>} : vector<64x64xbf16>, vector<64x128xbf16>, vector<64x128xf32> -> vector<64x128xf32>
    %c0_13 = arith.constant 0 : index
    %c0_14 = arith.constant 0 : index
    %18 = vector.load %arg7[%c0_13, %c0_14] : memref<64x1xf32, #tpu.memory_space<vmem>>, vector<64x1xf32>
    %19 = vector.broadcast %18 : vector<64x1xf32> to vector<64x128xf32>
    %20 = arith.addf %17, %19 : vector<64x128xf32>
    %21 = math.tanh %20 : vector<64x128xf32>
    %c0_15 = arith.constant 0 : index
    %c0_16 = arith.constant 0 : index
    %22 = vector.load %arg8[%c0_15, %c0_16] : memref<3x64xbf16, #tpu.memory_space<vmem>>, vector<3x64xbf16>
    %23 = arith.truncf %21 : vector<64x128xf32> to vector<64x128xbf16>
    %cst_17 = arith.constant dense<0.000000e+00> : vector<3x128xf32>
    %24 = tpu.matmul %22, %23, %cst_17 {dimension_numbers = #tpu.dot_dimension_numbers<[1], [0], [0], [1], [0, 0, 1, 1], [], []>} : vector<3x64xbf16>, vector<64x128xbf16>, vector<3x128xf32> -> vector<3x128xf32>
    %c0_18 = arith.constant 0 : index
    %c0_19 = arith.constant 0 : index
    %25 = vector.load %arg9[%c0_18, %c0_19] : memref<3x1xf32, #tpu.memory_space<vmem>>, vector<3x1xf32>
    %26 = vector.broadcast %25 : vector<3x1xf32> to vector<3x128xf32>
    %27 = arith.addf %24, %26 : vector<3x128xf32>
    %c0_20 = arith.constant 0 : index
    %c0_21 = arith.constant 0 : index
    %28 = vector.load %arg10[%c0_20, %c0_21] : memref<3x128xf32, #tpu.memory_space<vmem>>, vector<3x128xf32>
    tpu.vector_store %arg10[%c0_20, %c0_21], %27 {strides = array<i32>} : memref<3x128xf32, #tpu.memory_space<vmem>>, vector<3x128xf32>,
    return
  }
  func.func @transform_0(%arg0: i32) -> (i32, i32) {
    %c0_i32 = arith.constant 0 : i32
    %c0_i32_0 = arith.constant 0 : i32
    return %c0_i32, %arg0 : i32, i32
  }
  func.func @transform_1(%arg0: i32) -> (i32, i32) {
    %c0_i32 = arith.constant 0 : i32
    %c0_i32_0 = arith.constant 0 : i32
    %c0_i32_1 = arith.constant 0 : i32
    return %c0_i32, %c0_i32_0 : i32, i32
  }
  func.func @transform_2(%arg0: i32) -> (i32, i32) {
    %c0_i32 = arith.constant 0 : i32
    %c0_i32_0 = arith.constant 0 : i32
    %c0_i32_1 = arith.constant 0 : i32
    return %c0_i32, %c0_i32_0 : i32, i32
  }
  func.func @transform_3(%arg0: i32) -> (i32, i32) {
    %c0_i32 = arith.constant 0 : i32
    %c0_i32_0 = arith.constant 0 : i32
    %c0_i32_1 = arith.constant 0 : i32
    return %c0_i32, %c0_i32_0 : i32, i32
  }
  func.func @transform_4(%arg0: i32) -> (i32, i32) {
    %c0_i32 = arith.constant 0 : i32
    %c0_i32_0 = arith.constant 0 : i32
    %c0_i32_1 = arith.constant 0 : i32
    return %c0_i32, %c0_i32_0 : i32, i32
  }
  func.func @transform_5(%arg0: i32) -> (i32, i32) {
    %c0_i32 = arith.constant 0 : i32
    %c0_i32_0 = arith.constant 0 : i32
    %c0_i32_1 = arith.constant 0 : i32
    return %c0_i32, %c0_i32_0 : i32, i32
  }
  func.func @transform_6(%arg0: i32) -> (i32, i32) {
    %c0_i32 = arith.constant 0 : i32
    %c0_i32_0 = arith.constant 0 : i32
    %c0_i32_1 = arith.constant 0 : i32
    return %c0_i32, %c0_i32_0 : i32, i32
  }
  func.func @transform_7(%arg0: i32) -> (i32, i32) {
    %c0_i32 = arith.constant 0 : i32
    %c0_i32_0 = arith.constant 0 : i32
    %c0_i32_1 = arith.constant 0 : i32
    return %c0_i32, %c0_i32_0 : i32, i32
  }
  func.func @transform_8(%arg0: i32) -> (i32, i32) {
    %c0_i32 = arith.constant 0 : i32
    %c0_i32_0 = arith.constant 0 : i32
    %c0_i32_1 = arith.constant 0 : i32
    return %c0_i32, %c0_i32_0 : i32, i32
  }
  func.func @transform_9(%arg0: i32) -> (i32, i32) {
    %c0_i32 = arith.constant 0 : i32
    %c0_i32_0 = arith.constant 0 : i32
    return %c0_i32, %arg0 : i32, i32
  }
}

</mosaic_0001>

<llo_original>
// kernel: cloth_pinn_forward.1
$region0: #{cloth_pinn_forward.1}
  #allocation0 [shape = 'u32[]', space=smem, size = 0x4, offset = 0x4, fixed_abs, tag = 'smem constant byte address 0x4 - core index']
  #allocation1 [shape = 'u32[144,128]{1,0:T(1,128)}', space=vmem, size = 0x12000, scoped, tag = 'internal scratch']
  %s0 = inlined_call_operand.vmem [shape: f32[4,128], index: 0, kind: input, shape index: {}]
  %s1 = inlined_call_operand.vmem [shape: bf16[64,4], index: 1, kind: input, shape index: {}]
  %s2 = inlined_call_operand.vmem [shape: f32[64,1], index: 2, kind: input, shape index: {}]
  %s3 = inlined_call_operand.vmem [shape: bf16[64,64], index: 3, kind: input, shape index: {}]
  %s4 = inlined_call_operand.vmem [shape: f32[64,1], index: 4, kind: input, shape index: {}]
  %s5 = inlined_call_operand.vmem [shape: bf16[64,64], index: 5, kind: input, shape index: {}]
  %s6 = inlined_call_operand.vmem [shape: f32[64,1], index: 6, kind: input, shape index: {}]
  %s7 = inlined_call_operand.vmem [shape: bf16[3,64], index: 7, kind: input, shape index: {}]
  %s8 = inlined_call_operand.vmem [shape: f32[3,1], index: 8, kind: input, shape index: {}]
  %s9 = inlined_call_operand.vmem [shape: f32[3,128], index: 9, kind: output, shape index: {}]
  %s10 = sld [smem:[#allocation0]]
  $region46: #{cloth_pinn_forward.1} parent=0
    _
  %s12 = ssub.s32 1, %s10
  %s13 = scalar_select 0, %s12, %s10
  // Predicated region
  $region2: #{cloth_pinn_forward.1} parent=0 // pred_check
    _
  $region3: #{cloth_pinn_forward.1} parent=0 // pred_check_branch
    %15 = sbr.rel (0) target = $region5
  $region4: #{cloth_pinn_forward.1} parent=0 // pred_region
    _
  $region5: #{cloth_pinn_forward.1} parent=0 // pred_fallthru
    _
  // Predicated region
  $region6: #{cloth_pinn_forward.1} parent=0 // pred_check
    _
  $region7: #{cloth_pinn_forward.1} parent=0 // pred_check_branch
    %17 = sbr.rel (0) target = $region9
  $region8: #{cloth_pinn_forward.1} parent=0 // pred_region
    _
  $region9: #{cloth_pinn_forward.1} parent=0 // pred_fallthru
    _
  // Predicated region
  $region10: #{cloth_pinn_forward.1} parent=0 // pred_check
    _
  $region11: #{cloth_pinn_forward.1} parent=0 // pred_check_branch
    %19 = sbr.rel (0) target = $region13
  $region12: #{cloth_pinn_forward.1} parent=0 // pred_region
    _
  $region13: #{cloth_pinn_forward.1} parent=0 // pred_fallthru
    _
  // Predicated region
  $region14: #{cloth_pinn_forward.1} parent=0 // pred_check
    _
  $region15: #{cloth_pinn_forward.1} parent=0 // pred_check_branch
    %21 = sbr.rel (0) target = $region17
  $region16: #{cloth_pinn_forward.1} parent=0 // pred_region
    _
  $region17: #{cloth_pinn_forward.1} parent=0 // pred_fallthru
    _
  // Predicated region
  $region18: #{cloth_pinn_forward.1} parent=0 // pred_check
    _
  $region19: #{cloth_pinn_forward.1} parent=0 // pred_check_branch
    %23 = sbr.rel (0) target = $region21
  $region20: #{cloth_pinn_forward.1} parent=0 // pred_region
    _
  $region21: #{cloth_pinn_forward.1} parent=0 // pred_fallthru
    _
  // Predicated region
  $region22: #{cloth_pinn_forward.1} parent=0 // pred_check
    _
  $region23: #{cloth_pinn_forward.1} parent=0 // pred_check_branch
    %25 = sbr.rel (0) target = $region25
  $region24: #{cloth_pinn_forward.1} parent=0 // pred_region
    _
  $region25: #{cloth_pinn_forward.1} parent=0 // pred_fallthru
    _
  // Predicated region
  $region26: #{cloth_pinn_forward.1} parent=0 // pred_check
    _
  $region27: #{cloth_pinn_forward.1} parent=0 // pred_check_branch
    %27 = sbr.rel (0) target = $region29
  $region28: #{cloth_pinn_forward.1} parent=0 // pred_region
    _
  $region29: #{cloth_pinn_forward.1} parent=0 // pred_fallthru
    _
  // Predicated region
  $region30: #{cloth_pinn_forward.1} parent=0 // pred_check
    _
  $region31: #{cloth_pinn_forward.1} parent=0 // pred_check_branch
    %29 = sbr.rel (0) target = $region33
  $region32: #{cloth_pinn_forward.1} parent=0 // pred_region
    _
  $region33: #{cloth_pinn_forward.1} parent=0 // pred_fallthru
    _
  // Predicated region
  $region34: #{cloth_pinn_forward.1} parent=0 // pred_check
    _
  $region35: #{cloth_pinn_forward.1} parent=0 // pred_check_branch
    %31 = sbr.rel (0) target = $region37
  $region36: #{cloth_pinn_forward.1} parent=0 // pred_region
    _
  $region37: #{cloth_pinn_forward.1} parent=0 // pred_fallthru
    _
  %v33 = vld [vmem:[%s0] sm:$0xf]
  %v34 = vpack.c.bf16 %v33, %v33
  %v35 = vld [vmem:[%s1] sm:$0xf]
  %v36 = vld [vmem:[%s1 + $0x4] sm:$0xf]
  %v37 = vld [vmem:[%s1 + $0x8] sm:$0xf]
  %v38 = vld [vmem:[%s1 + $0xc] sm:$0xf]
  %v39 = vld [vmem:[%s1 + $0x10] sm:$0xf]
  %v40 = vld [vmem:[%s1 + $0x14] sm:$0xf]
  %v41 = vld [vmem:[%s1 + $0x18] sm:$0xf]
  %v42 = vld [vmem:[%s1 + $0x1c] sm:$0xf]
  %v43 = vld [vmem:[%s2] sm:$0xff]
  %v44 = vld [vmem:[%s2 + $0x8] sm:$0xff]
  %v45 = vld [vmem:[%s2 + $0x10] sm:$0xff]
  %v46 = vld [vmem:[%s2 + $0x18] sm:$0xff]
  %v47 = vld [vmem:[%s2 + $0x20] sm:$0xff]
  %v48 = vld [vmem:[%s2 + $0x28] sm:$0xff]
  %v49 = vld [vmem:[%s2 + $0x30] sm:$0xff]
  %v50 = vld [vmem:[%s2 + $0x38] sm:$0xff]
  %52 = vset.pattern.permute.xlu0 0
  %53 = vperm.xlu0 %52, %v43
  %v54 = vpop.permute.xlu0 %53
  %57 = vset.pattern.permute.xlu0 0
  %58 = vperm.xlu0 %57, %v44
  %v59 = vpop.permute.xlu0 %58
  %62 = vset.pattern.permute.xlu0 0
  %63 = vperm.xlu0 %62, %v45
  %v64 = vpop.permute.xlu0 %63
  %67 = vset.pattern.permute.xlu0 0
  %68 = vperm.xlu0 %67, %v46
  %v69 = vpop.permute.xlu0 %68
  %72 = vset.pattern.permute.xlu0 0
  %73 = vperm.xlu0 %72, %v47
  %v74 = vpop.permute.xlu0 %73
  %77 = vset.pattern.permute.xlu0 0
  %78 = vperm.xlu0 %77, %v48
  %v79 = vpop.permute.xlu0 %78
  %82 = vset.pattern.permute.xlu0 0
  %83 = vperm.xlu0 %82, %v49
  %v84 = vpop.permute.xlu0 %83
  %87 = vset.pattern.permute.xlu0 0
  %88 = vperm.xlu0 %87, %v50
  %v89 = vpop.permute.xlu0 %88
  %v99 = vunpack.c.l.b16 %v35
  %v100 = vunpack.c.l.b16 %v36
  %v101 = vunpack.c.l.b16 %v37
  %v102 = vunpack.c.l.b16 %v38
  %v103 = vunpack.c.l.b16 %v39
  %v104 = vunpack.c.l.b16 %v40
  %v105 = vunpack.c.l.b16 %v41
  %v106 = vunpack.c.l.b16 %v42
  %v107 = vpack.c.b16 %v100, %v99
  %v108 = vpack.c.b16 %v102, %v101
  %v109 = vpack.c.b16 %v104, %v103
  %v110 = vpack.c.b16 %v106, %v105
  %vm111 = vcmask 31744
  %v113 = vsel %vm111, %v107, 0
  %v116 = vsel %vm111, %v108, 0
  %v119 = vsel %vm111, %v109, 0
  %v122 = vsel %vm111, %v110, 0
  %vm124 = vcmask 1041408
  %v126 = vsel %vm124, %v34, 0
  %128 = vmatprep.subr.bf16.mxu0 0
  %129 = vmatpush1.bf16.msra.mxu0 %v126
  %130 = vmatprep.subr.bf16.mxu0 0
  %131 = vmatpush1.bf16.msra.mxu0 0
  %132 = vmatprep.subr.bf16.mxu0 0
  %133 = vmatpush1.bf16.msra.mxu0 0
  %134 = vmatprep.subr.bf16.mxu0 0
  %135 = vmatpush1.bf16.msra.mxu0 0
  %136 = vmatprep.subr.bf16.mxu0 0
  %137 = vmatpush1.bf16.msra.mxu0 0
  %138 = vmatprep.subr.bf16.mxu0 0
  %139 = vmatpush1.bf16.msra.mxu0 0
  %140 = vmatprep.subr.bf16.mxu0 0
  %141 = vmatpush1.bf16.msra.mxu0 0
  %142 = vmatprep.subr.bf16.mxu0 0
  %143 = vmatpush1.bf16.msra.mxu0 0
  %144 = vmatprep.subr.bf16.mxu0 0
  %145 = vmatpush1.bf16.msra.mxu0 0
  %146 = vmatprep.subr.bf16.mxu0 0
  %147 = vmatpush1.bf16.msra.mxu0 0
  %148 = vmatprep.subr.bf16.mxu0 0
  %149 = vmatpush1.bf16.msra.mxu0 0
  %150 = vmatprep.subr.bf16.mxu0 0
  %151 = vmatpush1.bf16.msra.mxu0 0
  %152 = vmatprep.subr.bf16.mxu0 0
  %153 = vmatpush1.bf16.msra.mxu0 0
  %154 = vmatprep.subr.bf16.mxu0 0
  %155 = vmatpush1.bf16.msra.mxu0 0
  %156 = vmatprep.subr.bf16.mxu0 0
  %157 = vmatpush1.bf16.msra.mxu0 0
  %158 = vmatprep.subr.bf16.mxu0 0
  %159 = vmatpush1.bf16.msra.mxu0 0
  %160 = vmatprep.mubr.bf16.mxu0 0
  %161 = vmatmul.mubr.bf16.gmra.mrb[0].mxu0 %v113
  %v162 = vpop.f32.mrb[0].mxu0
  %v163 = vadd.f32 %v54, %v162
  %v164 = vpop.f32.mrb[0].mxu0
  %v165 = vpop.f32.mrb[0].mxu0
  %v166 = vadd.f32 %v59, %v165
  %v167 = vpop.f32.mrb[0].mxu0
  %168 = vmatprep.mubr.bf16.mxu0 0
  %169 = vmatmul.mubr.bf16.gmra.mrb[0].mxu0 %v116
  %v170 = vpop.f32.mrb[0].mxu0
  %v171 = vadd.f32 %v64, %v170
  %v172 = vpop.f32.mrb[0].mxu0
  %v173 = vpop.f32.mrb[0].mxu0
  %v174 = vadd.f32 %v69, %v173
  %v175 = vpop.f32.mrb[0].mxu0
  %176 = vmatprep.mubr.bf16.mxu0 0
  %177 = vmatmul.mubr.bf16.gmra.mrb[0].mxu0 %v119
  %v178 = vpop.f32.mrb[0].mxu0
  %v179 = vadd.f32 %v74, %v178
  %v180 = vpop.f32.mrb[0].mxu0
  %v181 = vpop.f32.mrb[0].mxu0
  %v182 = vadd.f32 %v79, %v181
  %v183 = vpop.f32.mrb[0].mxu0
  %184 = vmatprep.mubr.bf16.mxu0 0
  %185 = vmatmul.mubr.bf16.gmra.mrb[0].mxu0 %v122
  %v186 = vpop.f32.mrb[0].mxu0
  %v187 = vadd.f32 %v84, %v186
  %v188 = vpop.f32.mrb[0].mxu0
  %v189 = vpop.f32.mrb[0].mxu0
  %v190 = vadd.f32 %v89, %v189
  %v191 = vpop.f32.mrb[0].mxu0
  %192 = vdwg.mxu0
  %v193 = vtanh.pop %v163
  %v194 = vtanh.pop %v166
  %v195 = vtanh.pop %v171
  %v196 = vtanh.pop %v174
  %v197 = vtanh.pop %v179
  %v198 = vtanh.pop %v182
  %v199 = vtanh.pop %v187
  %v200 = vtanh.pop %v190
  %v201 = vld [vmem:[%s3] sm:$0xf]
  %v202 = vld [vmem:[%s3 + $0x4] sm:$0xf]
  %v203 = vld [vmem:[%s3 + $0x8] sm:$0xf]
  %v204 = vld [vmem:[%s3 + $0xc] sm:$0xf]
  %v205 = vld [vmem:[%s3 + $0x10] sm:$0xf]
  %v206 = vld [vmem:[%s3 + $0x14] sm:$0xf]
  %v207 = vld [vmem:[%s3 + $0x18] sm:$0xf]
  %v208 = vld [vmem:[%s3 + $0x1c] sm:$0xf]
  %v209 = vpack.c.bf16 %v194, %v193
  %v210 = vpack.c.bf16 %v196, %v195
  %v211 = vpack.c.bf16 %v198, %v197
  %v212 = vpack.c.bf16 %v200, %v199
  %v213 = vld [vmem:[%s4] sm:$0xff]
  %v214 = vld [vmem:[%s4 + $0x8] sm:$0xff]
  %v215 = vld [vmem:[%s4 + $0x10] sm:$0xff]
  %v216 = vld [vmem:[%s4 + $0x18] sm:$0xff]
  %v217 = vld [vmem:[%s4 + $0x20] sm:$0xff]
  %v218 = vld [vmem:[%s4 + $0x28] sm:$0xff]
  %v219 = vld [vmem:[%s4 + $0x30] sm:$0xff]
  %v220 = vld [vmem:[%s4 + $0x38] sm:$0xff]
  %222 = vset.pattern.permute.xlu0 0
  %223 = vperm.xlu0 %222, %v213
  %v224 = vpop.permute.xlu0 %223
  %227 = vset.pattern.permute.xlu0 0
  %228 = vperm.xlu0 %227, %v214
  %v229 = vpop.permute.xlu0 %228
  %232 = vset.pattern.permute.xlu0 0
  %233 = vperm.xlu0 %232, %v215
  %v234 = vpop.permute.xlu0 %233
  %237 = vset.pattern.permute.xlu0 0
  %238 = vperm.xlu0 %237, %v216
  %v239 = vpop.permute.xlu0 %238
  %242 = vset.pattern.permute.xlu0 0
  %243 = vperm.xlu0 %242, %v217
  %v244 = vpop.permute.xlu0 %243
  %247 = vset.pattern.permute.xlu0 0
  %248 = vperm.xlu0 %247, %v218
  %v249 = vpop.permute.xlu0 %248
  %252 = vset.pattern.permute.xlu0 0
  %253 = vperm.xlu0 %252, %v219
  %v254 = vpop.permute.xlu0 %253
  %257 = vset.pattern.permute.xlu0 0
  %258 = vperm.xlu0 %257, %v220
  %v259 = vpop.permute.xlu0 %258
  %v269 = vunpack.c.l.b16 %v201
  %v270 = vunpack.c.l.b16 %v202
  %v271 = vunpack.c.l.b16 %v203
  %v272 = vunpack.c.l.b16 %v204
  %v273 = vunpack.c.l.b16 %v205
  %v274 = vunpack.c.l.b16 %v206
  %v275 = vunpack.c.l.b16 %v207
  %v276 = vunpack.c.l.b16 %v208
  %v277 = vpack.c.b16 %v270, %v269
  %v278 = vpack.c.b16 %v272, %v271
  %v279 = vpack.c.b16 %v274, %v273
  %v280 = vpack.c.b16 %v276, %v275
  %vm281 = vcmask 523264
  %v283 = vsel %vm281, %v277, 0
  %v286 = vsel %vm281, %v278, 0
  %v289 = vsel %vm281, %v279, 0
  %v292 = vsel %vm281, %v280, 0
  %294 = vmatprep.subr.bf16.mxu0 0
  %295 = vmatpush1.bf16.msra.mxu0 %v209
  %296 = vmatprep.subr.bf16.mxu0 0
  %297 = vmatpush1.bf16.msra.mxu0 %v210
  %298 = vmatprep.subr.bf16.mxu0 0
  %299 = vmatpush1.bf16.msra.mxu0 %v211
  %300 = vmatprep.subr.bf16.mxu0 0
  %301 = vmatpush1.bf16.msra.mxu0 %v212
  %302 = vmatprep.subr.bf16.mxu0 0
  %303 = vmatpush1.bf16.msra.mxu0 0
  %304 = vmatprep.subr.bf16.mxu0 0
  %305 = vmatpush1.bf16.msra.mxu0 0
  %306 = vmatprep.subr.bf16.mxu0 0
  %307 = vmatpush1.bf16.msra.mxu0 0
  %308 = vmatprep.subr.bf16.mxu0 0
  %309 = vmatpush1.bf16.msra.mxu0 0
  %310 = vmatprep.subr.bf16.mxu0 0
  %311 = vmatpush1.bf16.msra.mxu0 0
  %312 = vmatprep.subr.bf16.mxu0 0
  %313 = vmatpush1.bf16.msra.mxu0 0
  %314 = vmatprep.subr.bf16.mxu0 0
  %315 = vmatpush1.bf16.msra.mxu0 0
  %316 = vmatprep.subr.bf16.mxu0 0
  %317 = vmatpush1.bf16.msra.mxu0 0
  %318 = vmatprep.subr.bf16.mxu0 0
  %319 = vmatpush1.bf16.msra.mxu0 0
  %320 = vmatprep.subr.bf16.mxu0 0
  %321 = vmatpush1.bf16.msra.mxu0 0
  %322 = vmatprep.subr.bf16.mxu0 0
  %323 = vmatpush1.bf16.msra.mxu0 0
  %324 = vmatprep.subr.bf16.mxu0 0
  %325 = vmatpush1.bf16.msra.mxu0 0
  %326 = vmatprep.mubr.bf16.mxu0 0
  %327 = vmatmul.mubr.bf16.gmra.mrb[0].mxu0 %v283
  %v328 = vpop.f32.mrb[0].mxu0
  %v329 = vadd.f32 %v224, %v328
  %v330 = vpop.f32.mrb[0].mxu0
  %v331 = vpop.f32.mrb[0].mxu0
  %v332 = vadd.f32 %v229, %v331
  %v333 = vpop.f32.mrb[0].mxu0
  %334 = vmatprep.mubr.bf16.mxu0 0
  %335 = vmatmul.mubr.bf16.gmra.mrb[0].mxu0 %v286
  %v336 = vpop.f32.mrb[0].mxu0
  %v337 = vadd.f32 %v234, %v336
  %v338 = vpop.f32.mrb[0].mxu0
  %v339 = vpop.f32.mrb[0].mxu0
  %v340 = vadd.f32 %v239, %v339
  %v341 = vpop.f32.mrb[0].mxu0
  %342 = vmatprep.mubr.bf16.mxu0 0
  %343 = vmatmul.mubr.bf16.gmra.mrb[0].mxu0 %v289
  %v344 = vpop.f32.mrb[0].mxu0
  %v345 = vadd.f32 %v244, %v344
  %v346 = vpop.f32.mrb[0].mxu0
  %v347 = vpop.f32.mrb[0].mxu0
  %v348 = vadd.f32 %v249, %v347
  %v349 = vpop.f32.mrb[0].mxu0
  %350 = vmatprep.mubr.bf16.mxu0 0
  %351 = vmatmul.mubr.bf16.gmra.mrb[0].mxu0 %v292
  %v352 = vpop.f32.mrb[0].mxu0
  %v353 = vadd.f32 %v254, %v352
  %v354 = vpop.f32.mrb[0].mxu0
  %v355 = vpop.f32.mrb[0].mxu0
  %v356 = vadd.f32 %v259, %v355
  %v357 = vpop.f32.mrb[0].mxu0
  %358 = vdwg.mxu0
  %v359 = vtanh.pop %v329
  %v360 = vtanh.pop %v332
  %v361 = vtanh.pop %v337
  %v362 = vtanh.pop %v340
  %v363 = vtanh.pop %v345
  %v364 = vtanh.pop %v348
  %v365 = vtanh.pop %v353
  %v366 = vtanh.pop %v356
  %v367 = vld [vmem:[%s5] sm:$0xf]
  %v368 = vld [vmem:[%s5 + $0x4] sm:$0xf]
  %v369 = vld [vmem:[%s5 + $0x8] sm:$0xf]
  %v370 = vld [vmem:[%s5 + $0xc] sm:$0xf]
  %v371 = vld [vmem:[%s5 + $0x10] sm:$0xf]
  %v372 = vld [vmem:[%s5 + $0x14] sm:$0xf]
  %v373 = vld [vmem:[%s5 + $0x18] sm:$0xf]
  %v374 = vld [vmem:[%s5 + $0x1c] sm:$0xf]
  %v375 = vpack.c.bf16 %v360, %v359
  %v376 = vpack.c.bf16 %v362, %v361
  %v377 = vpack.c.bf16 %v364, %v363
  %v378 = vpack.c.bf16 %v366, %v365
  %v379 = vld [vmem:[%s6] sm:$0xff]
  %v380 = vld [vmem:[%s6 + $0x8] sm:$0xff]
  %v381 = vld [vmem:[%s6 + $0x10] sm:$0xff]
  %v382 = vld [vmem:[%s6 + $0x18] sm:$0xff]
  %v383 = vld [vmem:[%s6 + $0x20] sm:$0xff]
  %v384 = vld [vmem:[%s6 + $0x28] sm:$0xff]
  %v385 = vld [vmem:[%s6 + $0x30] sm:$0xff]
  %v386 = vld [vmem:[%s6 + $0x38] sm:$0xff]
  %388 = vset.pattern.permute.xlu0 0
  %389 = vperm.xlu0 %388, %v379
  %v390 = vpop.permute.xlu0 %389
  %393 = vset.pattern.permute.xlu0 0
  %394 = vperm.xlu0 %393, %v380
  %v395 = vpop.permute.xlu0 %394
  %398 = vset.pattern.permute.xlu0 0
  %399 = vperm.xlu0 %398, %v381
  %v400 = vpop.permute.xlu0 %399
  %403 = vset.pattern.permute.xlu0 0
  %404 = vperm.xlu0 %403, %v382
  %v405 = vpop.permute.xlu0 %404
  %408 = vset.pattern.permute.xlu0 0
  %409 = vperm.xlu0 %408, %v383
  %v410 = vpop.permute.xlu0 %409
  %413 = vset.pattern.permute.xlu0 0
  %414 = vperm.xlu0 %413, %v384
  %v415 = vpop.permute.xlu0 %414
  %418 = vset.pattern.permute.xlu0 0
  %419 = vperm.xlu0 %418, %v385
  %v420 = vpop.permute.xlu0 %419
  %423 = vset.pattern.permute.xlu0 0
  %424 = vperm.xlu0 %423, %v386
  %v425 = vpop.permute.xlu0 %424
  %v435 = vunpack.c.l.b16 %v367
  %v436 = vunpack.c.l.b16 %v368
  %v437 = vunpack.c.l.b16 %v369
  %v438 = vunpack.c.l.b16 %v370
  %v439 = vunpack.c.l.b16 %v371
  %v440 = vunpack.c.l.b16 %v372
  %v441 = vunpack.c.l.b16 %v373
  %v442 = vunpack.c.l.b16 %v374
  %v443 = vpack.c.b16 %v436, %v435
  %v444 = vpack.c.b16 %v438, %v437
  %v445 = vpack.c.b16 %v440, %v439
  %v446 = vpack.c.b16 %v442, %v441
  %v448 = vsel %vm281, %v443, 0
  %v451 = vsel %vm281, %v444, 0
  %v454 = vsel %vm281, %v445, 0
  %v457 = vsel %vm281, %v446, 0
  %459 = vmatprep.subr.bf16.mxu0 0
  %460 = vmatpush1.bf16.msra.mxu0 %v375
  %461 = vmatprep.subr.bf16.mxu0 0
  %462 = vmatpush1.bf16.msra.mxu0 %v376
  %463 = vmatprep.subr.bf16.mxu0 0
  %464 = vmatpush1.bf16.msra.mxu0 %v377
  %465 = vmatprep.subr.bf16.mxu0 0
  %466 = vmatpush1.bf16.msra.mxu0 %v378
  %467 = vmatprep.subr.bf16.mxu0 0
  %468 = vmatpush1.bf16.msra.mxu0 0
  %469 = vmatprep.subr.bf16.mxu0 0
  %470 = vmatpush1.bf16.msra.mxu0 0
  %471 = vmatprep.subr.bf16.mxu0 0
  %472 = vmatpush1.bf16.msra.mxu0 0
  %473 = vmatprep.subr.bf16.mxu0 0
  %474 = vmatpush1.bf16.msra.mxu0 0
  %475 = vmatprep.subr.bf16.mxu0 0
  %476 = vmatpush1.bf16.msra.mxu0 0
  %477 = vmatprep.subr.bf16.mxu0 0
  %478 = vmatpush1.bf16.msra.mxu0 0
  %479 = vmatprep.subr.bf16.mxu0 0
  %480 = vmatpush1.bf16.msra.mxu0 0
  %481 = vmatprep.subr.bf16.mxu0 0
  %482 = vmatpush1.bf16.msra.mxu0 0
  %483 = vmatprep.subr.bf16.mxu0 0
  %484 = vmatpush1.bf16.msra.mxu0 0
  %485 = vmatprep.subr.bf16.mxu0 0
  %486 = vmatpush1.bf16.msra.mxu0 0
  %487 = vmatprep.subr.bf16.mxu0 0
  %488 = vmatpush1.bf16.msra.mxu0 0
  %489 = vmatprep.subr.bf16.mxu0 0
  %490 = vmatpush1.bf16.msra.mxu0 0
  %491 = vmatprep.mubr.bf16.mxu0 0
  %492 = vmatmul.mubr.bf16.gmra.mrb[0].mxu0 %v448
  %v493 = vpop.f32.mrb[0].mxu0
  %v494 = vadd.f32 %v390, %v493
  %v495 = vpop.f32.mrb[0].mxu0
  %v496 = vpop.f32.mrb[0].mxu0
  %v497 = vadd.f32 %v395, %v496
  %v498 = vpop.f32.mrb[0].mxu0
  %499 = vmatprep.mubr.bf16.mxu0 0
  %500 = vmatmul.mubr.bf16.gmra.mrb[0].mxu0 %v451
  %v501 = vpop.f32.mrb[0].mxu0
  %v502 = vadd.f32 %v400, %v501
  %v503 = vpop.f32.mrb[0].mxu0
  %v504 = vpop.f32.mrb[0].mxu0
  %v505 = vadd.f32 %v405, %v504
  %v506 = vpop.f32.mrb[0].mxu0
  %507 = vmatprep.mubr.bf16.mxu0 0
  %508 = vmatmul.mubr.bf16.gmra.mrb[0].mxu0 %v454
  %v509 = vpop.f32.mrb[0].mxu0
  %v510 = vadd.f32 %v410, %v509
  %v511 = vpop.f32.mrb[0].mxu0
  %v512 = vpop.f32.mrb[0].mxu0
  %v513 = vadd.f32 %v415, %v512
  %v514 = vpop.f32.mrb[0].mxu0
  %515 = vmatprep.mubr.bf16.mxu0 0
  %516 = vmatmul.mubr.bf16.gmra.mrb[0].mxu0 %v457
  %v517 = vpop.f32.mrb[0].mxu0
  %v518 = vadd.f32 %v420, %v517
  %v519 = vpop.f32.mrb[0].mxu0
  %v520 = vpop.f32.mrb[0].mxu0
  %v521 = vadd.f32 %v425, %v520
  %v522 = vpop.f32.mrb[0].mxu0
  %523 = vdwg.mxu0
  %v524 = vtanh.pop %v494
  %v525 = vtanh.pop %v497
  %v526 = vtanh.pop %v502
  %v527 = vtanh.pop %v505
  %v528 = vtanh.pop %v510
  %v529 = vtanh.pop %v513
  %v530 = vtanh.pop %v518
  %v531 = vtanh.pop %v521
  %v532 = vld [vmem:[%s7] sm:$0x3]
  %v533 = vpack.c.bf16 %v525, %v524
  %v534 = vpack.c.bf16 %v527, %v526
  %v535 = vpack.c.bf16 %v529, %v528
  %v536 = vpack.c.bf16 %v531, %v530
  %v537 = vld [vmem:[%s8] sm:$0x7]
  %539 = vset.pattern.permute.xlu0 0
  %540 = vperm.xlu0 %539, %v537
  %v541 = vpop.permute.xlu0 %540
  %v544 = vsel %vm281, %v532, 0
  %546 = vmatprep.subr.bf16.mxu0 0
  %547 = vmatpush1.bf16.msra.mxu0 %v533
  %548 = vmatprep.subr.bf16.mxu0 0
  %549 = vmatpush1.bf16.msra.mxu0 %v534
  %550 = vmatprep.subr.bf16.mxu0 0
  %551 = vmatpush1.bf16.msra.mxu0 %v535
  %552 = vmatprep.subr.bf16.mxu0 0
  %553 = vmatpush1.bf16.msra.mxu0 %v536
  %554 = vmatprep.subr.bf16.mxu0 0
  %555 = vmatpush1.bf16.msra.mxu0 0
  %556 = vmatprep.subr.bf16.mxu0 0
  %557 = vmatpush1.bf16.msra.mxu0 0
  %558 = vmatprep.subr.bf16.mxu0 0
  %559 = vmatpush1.bf16.msra.mxu0 0
  %560 = vmatprep.subr.bf16.mxu0 0
  %561 = vmatpush1.bf16.msra.mxu0 0
  %562 = vmatprep.subr.bf16.mxu0 0
  %563 = vmatpush1.bf16.msra.mxu0 0
  %564 = vmatprep.subr.bf16.mxu0 0
  %565 = vmatpush1.bf16.msra.mxu0 0
  %566 = vmatprep.subr.bf16.mxu0 0
  %567 = vmatpush1.bf16.msra.mxu0 0
  %568 = vmatprep.subr.bf16.mxu0 0
  %569 = vmatpush1.bf16.msra.mxu0 0
  %570 = vmatprep.subr.bf16.mxu0 0
  %571 = vmatpush1.bf16.msra.mxu0 0
  %572 = vmatprep.subr.bf16.mxu0 0
  %573 = vmatpush1.bf16.msra.mxu0 0
  %574 = vmatprep.subr.bf16.mxu0 0
  %575 = vmatpush1.bf16.msra.mxu0 0
  %576 = vmatprep.subr.bf16.mxu0 0
  %577 = vmatpush1.bf16.msra.mxu0 0
  %578 = vmatprep.mubr.bf16.mxu0 0
  %579 = vmatmul.mubr.bf16.gmra.mrb[0].mxu0 %v544
  %v580 = vpop.f32.mrb[0].mxu0
  %v581 = vadd.f32 %v541, %v580
  %v582 = vpop.f32.mrb[0].mxu0
  %v583 = vpop.f32.mrb[0].mxu0
  %v584 = vpop.f32.mrb[0].mxu0
  %585 = vdwg.mxu0
  %586 = vst [vmem:[%s9] sm:$0x7] %v581
  // Predicated region
  $region38: #{cloth_pinn_forward.1} parent=0 // pred_check
    _
  $region39: #{cloth_pinn_forward.1} parent=0 // pred_check_branch
    %588 = sbr.rel (0) target = $region41
  $region40: #{cloth_pinn_forward.1} parent=0 // pred_region
    _
  $region41: #{cloth_pinn_forward.1} parent=0 // pred_fallthru
    _
  // Predicated region
  $region42: #{cloth_pinn_forward.1} parent=0 // pred_check
    _
  $region43: #{cloth_pinn_forward.1} parent=0 // pred_check_branch
    %590 = sbr.rel (0) target = $region45
  $region44: #{cloth_pinn_forward.1} parent=0 // pred_region
    _
  $region45: #{cloth_pinn_forward.1} parent=0 // pred_fallthru
    _

</llo_original>
